<compile_context>
chip_gen: v6e
topology: v6e:2x2x1
jax: 0.10.0
libtpu: 0.0.40
codegen_flags: <defaults>
</compile_context>

<pallas_src>
import functools

import jax
import jax.numpy as jnp
import numpy as np
from jax import lax
from jax.experimental import pallas as pl
from jax.experimental.pallas import tpu as pltpu

MIN_MARGIN = 0.2
MAX_MARGIN = 0.9
DURATION_WEIGHT = 0.3

_LANES = 128
_SUBLANES = 8
# 2048 rows x 128 lanes x 4 B = 1 MiB per f32 stream buffer; 3 streams x 2
# buffers = 6 MiB, comfortably inside scoped VMEM on v5e/v6e/v7x (limit raised
# to 32 MiB below for intermediate headroom).
_DEFAULT_TILE_ROWS = 2048


def _round_up(x, m):
    return (x + m - 1) // m * m


def _stable_bce_with_logits(adj, t):
    # max(x,0) - x*t + log1p(exp(-|x|)): one exp + one log1p per element.
    return jnp.maximum(adj, 0.0) - adj * t + jnp.log1p(jnp.exp(-jnp.abs(adj)))


def _accumulate(out_ref, loss_elem, rt, *, tr, full_rows, rem, row_tiles,
                needs_mask, needs_skip):
    """Partial-reduce loss_elem into the per-core (1,8,128) output block.

    needs_mask: the grid covers rows past the valid data (ragged last tile /
                sub-128 tail) -> mask only on that tile (pl.when gated).
    needs_skip: the rectangular (2, steps) grid has one duplicated (clamped)
                tile at the end -> skip its accumulation entirely.
    """
    def add(vals):
        out_ref[...] += jnp.sum(
            vals.reshape(tr // _SUBLANES, _SUBLANES, _LANES), axis=0)[None]

    if not (needs_mask or needs_skip):
        add(loss_elem)
        return

    if needs_mask and needs_skip:
        ragged = (rt + 1) * tr > full_rows
        valid = rt < row_tiles
        full_cond = jnp.logical_and(valid, jnp.logical_not(ragged))
        tail_cond = jnp.logical_and(valid, ragged)
    elif needs_mask:
        ragged = (rt + 1) * tr > full_rows
        full_cond = jnp.logical_not(ragged)
        tail_cond = ragged
    else:  # needs_skip only
        full_cond = rt < row_tiles
        tail_cond = None

    @pl.when(full_cond)
    def _full():
        add(loss_elem)

    if tail_cond is not None:
        @pl.when(tail_cond)
        def _tail():
            # Mask by original flat element count: rows < full_rows are fully
            # valid; row == full_rows has `rem` valid lanes; anything beyond
            # (zero padding or stale VMEM from the partial DMA) contributes 0.
            grow = rt * tr + lax.broadcasted_iota(jnp.int32, (tr, _LANES), 0)
            lane = lax.broadcasted_iota(jnp.int32, (tr, _LANES), 1)
            ok = jnp.logical_or(
                grow < full_rows,
                jnp.logical_and(grow == full_rows, lane < rem))
            add(jnp.where(ok, loss_elem, 0.0))


def _margin_loss_kernel(sc_ref, x_ref, t_ref, d_ref, out_ref, *,
                        tr, full_rows, rem, row_tiles, inner_steps,
                        needs_mask, needs_skip, duration_weight):
    c = pl.program_id(0)          # parallel axis (per-TensorCore partial)
    i = pl.program_id(1)          # arbitrary (reduction) axis
    rt = c * inner_steps + i      # global row-tile index (unclamped)

    @pl.when(i == 0)
    def _init():
        out_ref[...] = jnp.zeros_like(out_ref)

    offset = sc_ref[0]            # max_margin if max_d > 0 else min_margin
    scale = sc_ref[1]             # (max_margin - min_margin) / max_d  (or 0.0)

    # Native-dtype loads; cast to f32 in-register (free VPU work).
    x = x_ref[...].astype(jnp.float32)
    t = t_ref[...].astype(jnp.float32)
    d = d_ref[...].astype(jnp.float32)

    margins = offset - d * scale
    adj = x * (1.0 + margins * (2.0 * t - 1.0))
    bce = _stable_bce_with_logits(adj, t)
    # Exact reciprocal: kernel is HBM-bound, so this is free and matches the
    # PyTorch reference more closely than the approx EUP reciprocal.
    recip = pl.reciprocal(1.0 + d * 1e-3, approx=False)
    loss_elem = bce + duration_weight * recip

    _accumulate(out_ref, loss_elem, rt, tr=tr, full_rows=full_rows, rem=rem,
                row_tiles=row_tiles, needs_mask=needs_mask,
                needs_skip=needs_skip)


def _bce_mean_kernel(x_ref, t_ref, out_ref, *,
                     tr, full_rows, rem, row_tiles, inner_steps,
                     needs_mask, needs_skip):
    c = pl.program_id(0)
    i = pl.program_id(1)
    rt = c * inner_steps + i

    @pl.when(i == 0)
    def _init():
        out_ref[...] = jnp.zeros_like(out_ref)

    x = x_ref[...].astype(jnp.float32)
    t = t_ref[...].astype(jnp.float32)
    loss_elem = _stable_bce_with_logits(x, t)

    _accumulate(out_ref, loss_elem, rt, tr=tr, full_rows=full_rows, rem=rem,
                row_tiles=row_tiles, needs_mask=needs_mask,
                needs_skip=needs_skip)


def adaptive_large_margin_loss(inputs, targets, durations=None,
                               min_margin=MIN_MARGIN,
                               max_margin=MAX_MARGIN,
                               duration_weight=DURATION_WEIGHT,
                               tile_rows=_DEFAULT_TILE_ROWS):
    # TODO(synk): the PyTorch module takes an arbitrary `base_loss` callable;
    # this implementation assumes BCEWithLogitsLoss with mean reduction.
    # TODO(synk): assumes `durations` has the same number of elements as
    # `inputs` so the fused per-element penalty mean equals torch.mean(durations).
    x = inputs.reshape(-1)
    t = targets.reshape(-1)
    if t.dtype == jnp.bool_:
        t = t.astype(jnp.int8)  # cheap 1-byte convert; kernel casts to f32
    total = int(x.shape[0])
    assert total > 0

    streams = [x, t]
    d = None
    if durations is not None:
        d = durations.reshape(-1)
        streams.append(d)

    full_rows, rem = divmod(total, _LANES)
    rows = full_rows + (1 if rem else 0)

    # Row-tile must satisfy the sublane packing of the narrowest dtype present
    # (f32: 8, bf16: 16, int8/bool: 32).
    packing = max(max(1, 4 // jnp.dtype(s.dtype).itemsize) for s in streams)
    sub = _SUBLANES * packing
    tr = min(_round_up(max(int(tile_rows), 1), sub), _round_up(rows, sub))
    row_tiles = -(-rows // tr)

    # Two-way split of the row tiles -> parallel outer axis (engages both
    # TensorCores on v7x; harmless sequential outer loop on v5e/v6e).
    num_par = 2 if row_tiles >= 2 else 1
    inner_steps = -(-row_tiles // num_par)
    needs_mask = (row_tiles * tr != full_rows)           # ragged tail anywhere?
    needs_skip = (num_par * inner_steps > row_tiles)     # duplicated last tile?

    def to_2d(flat):
        # Zero-copy (pure reshape) when total is a multiple of 128; otherwise a
        # single pad to the next 128-lane boundary (the only wrapper-side copy).
        if rem:
            flat = jnp.pad(flat, (0, _LANES - rem))
        return flat.reshape(rows, _LANES)

    def in_index(c, i):
        rt = c * inner_steps + i
        if needs_skip:
            rt = jnp.minimum(rt, row_tiles - 1)  # clamp the fully-OOB dup tile
        return (rt, 0)

    tensor_spec = pl.BlockSpec((tr, _LANES), in_index)
    cfg = dict(tr=tr, full_rows=full_rows, rem=rem, row_tiles=row_tiles,
               inner_steps=inner_steps, needs_mask=needs_mask,
               needs_skip=needs_skip)
    common = dict(
        out_shape=jax.ShapeDtypeStruct((num_par, _SUBLANES, _LANES),
                                       jnp.float32),
        out_specs=pl.BlockSpec((1, _SUBLANES, _LANES), lambda c, i: (c, 0, 0)),
        grid=(num_par, inner_steps),
        compiler_params=pltpu.CompilerParams(
            dimension_semantics=("parallel", "arbitrary"),
            vmem_limit_bytes=32 * 1024 * 1024),
    )

    if durations is None:
        kernel = functools.partial(_bce_mean_kernel, **cfg)
        partials = pl.pallas_call(kernel, in_specs=[tensor_spec, tensor_spec],
                                  **common)(to_2d(x), to_2d(t))
    else:
        # Global max(durations) hoisted to the wrapper (required once tiled);
        # the kernel receives precomputed (offset, scale) via SMEM.
        max_d = jnp.max(d).astype(jnp.float32)
        pos = max_d > 0.0
        offset = jnp.where(pos, jnp.float32(max_margin), jnp.float32(min_margin))
        scale = jnp.where(
            pos, (max_margin - min_margin) / jnp.where(pos, max_d, 1.0), 0.0)
        sc = jnp.stack([offset, scale]).astype(jnp.float32)  # (2,) in SMEM

        kernel = functools.partial(
            _margin_loss_kernel, duration_weight=float(duration_weight), **cfg)
        partials = pl.pallas_call(
            kernel,
            in_specs=[pl.BlockSpec(memory_space=pltpu.SMEM),  # (offset, scale)
                      tensor_spec, tensor_spec, tensor_spec],
            **common)(sc, to_2d(x), to_2d(t), to_2d(d))

    # Tiny epilogue: sum the per-core (8,128) partials and normalize.
    return jnp.sum(partials) * (1.0 / float(total))


def _reference(inputs, targets, durations=None,
               min_margin=MIN_MARGIN, max_margin=MAX_MARGIN,
               duration_weight=DURATION_WEIGHT):
    inputs = inputs.astype(jnp.float32)
    targets = targets.astype(jnp.float32)

    def bce_mean(x, t):
        return jnp.mean(jnp.maximum(x, 0.0) - x * t
                        + jnp.log1p(jnp.exp(-jnp.abs(x))))

    if durations is None:
        return bce_mean(inputs, targets)
    durations = durations.astype(jnp.float32)
    max_d = jnp.max(durations)
    margins = jnp.where(
        max_d > 0.0,
        max_margin - (durations / jnp.where(max_d > 0.0, max_d, 1.0))
        * (max_margin - min_margin),
        jnp.full_like(targets, min_margin),
    )
    adj = inputs * (1.0 + margins * (2.0 * targets - 1.0))
    pen = duration_weight * jnp.mean(1.0 / (1.0 + durations / 1000.0))
    return bce_mean(adj, targets) + pen


if __name__ == "__main__":
    key = jax.random.PRNGKey(0)
    ks = jax.random.split(key, 9)

    # Case 1: lane-aligned, native mixed dtypes (bf16 logits, bool targets),
    # zero-copy wrapper path.
    x1 = jax.random.normal(ks[0], (32, 128), jnp.float32).astype(jnp.bfloat16)
    t1 = jax.random.bernoulli(ks[1], 0.5, (32, 128))                   # bool
    d1 = jax.random.uniform(ks[2], (32, 128), jnp.float32, 0.0, 5000.0)
    loss1 = adaptive_large_margin_loss(x1, t1, d1)
    jax.block_until_ready(loss1)
    np.testing.assert_allclose(np.asarray(loss1),
                               np.asarray(_reference(x1, t1, d1)),
                               rtol=5e-4, atol=1e-5)

    # Case 2: ragged total (600 elements): pad-to-128 + gated in-kernel tail mask.
    x2 = jax.random.normal(ks[3], (6, 100), jnp.float32)
    t2 = jax.random.bernoulli(ks[4], 0.5, (6, 100)).astype(jnp.float32)
    d2 = jax.random.uniform(ks[5], (6, 100), jnp.float32, 0.0, 3000.0)
    loss2 = adaptive_large_margin_loss(x2, t2, d2)
    jax.block_until_ready(loss2)
    np.testing.assert_allclose(np.asarray(loss2),
                               np.asarray(_reference(x2, t2, d2)),
                               rtol=1e-4, atol=1e-5)

    # Case 3: multi-tile + 2-way parallel split with a duplicated (skipped) tail
    # tile; all-zero durations exercise the max_d == 0 branch.
    x3 = jax.random.normal(ks[6], (40, 128), jnp.float32)
    t3 = jax.random.bernoulli(ks[7], 0.5, (40, 128)).astype(jnp.float32)
    d3 = jnp.zeros((40, 128), jnp.float32)
    loss3 = adaptive_large_margin_loss(x3, t3, d3, tile_rows=8)
    jax.block_until_ready(loss3)
    np.testing.assert_allclose(np.asarray(loss3),
                               np.asarray(_reference(x3, t3, d3)),
                               rtol=1e-4, atol=1e-5)

    # Case 4: durations=None path (trace-time specialized plain-BCE kernel).
    loss4 = adaptive_large_margin_loss(x2, t2, None)
    jax.block_until_ready(loss4)
    np.testing.assert_allclose(np.asarray(loss4),
                               np.asarray(_reference(x2, t2, None)),
                               rtol=1e-5, atol=1e-6)

    print("KERNEL_OK")
</pallas_src>

<mosaic_0001>
module attributes {stable_mosaic.version = 11 : i64} {
  func.func @_margin_loss_kernel(%arg0: i32, %arg1: i32, %arg2: memref<2xf32, #tpu.memory_space<smem>>, %arg3: memref<32x128xbf16, #tpu.memory_space<vmem>>, %arg4: memref<32x128xi8, #tpu.memory_space<vmem>>, %arg5: memref<32x128xf32, #tpu.memory_space<vmem>>, %arg6: memref<1x8x128xf32, #tpu.memory_space<vmem>>) attributes {dimension_semantics = [#tpu.dimension_semantics<parallel>, #tpu.dimension_semantics<arbitrary>], iteration_bounds = array<i64: 1, 1>, scalar_prefetch = 0 : i64, scratch_operands = 0 : i64, tpu.core_type = #tpu.core_type<tc>, window_params = [{transform_indices = @transform_0, window_bounds = array<i64: 2>}, {transform_indices = @transform_1, window_bounds = array<i64: 32, 128>}, {transform_indices = @transform_2, window_bounds = array<i64: 32, 128>}, {transform_indices = @transform_3, window_bounds = array<i64: 32, 128>}, {transform_indices = @transform_4, window_bounds = array<i64: 1, 8, 128>}]} {
    %c0_i32 = arith.constant 0 : i32
    %0 = arith.cmpi eq, %arg1, %c0_i32 : i32
    %1 = arith.extui %0 : i1 to i32
    %c0_i32_0 = arith.constant 0 : i32
    %2 = arith.cmpi ne, %1, %c0_i32_0 : i32
    scf.if %2 {
      %cst_21 = arith.constant 0.000000e+00 : f32
      %46 = vector.broadcast %cst_21 : f32 to vector<1x8x128xf32>
      %c0_22 = arith.constant 0 : index
      %c0_23 = arith.constant 0 : index
      %c0_24 = arith.constant 0 : index
      %47 = vector.load %arg6[%c0_22, %c0_23, %c0_24] : memref<1x8x128xf32, #tpu.memory_space<vmem>>, vector<1x8x128xf32>
      tpu.vector_store %arg6[%c0_22, %c0_23, %c0_24], %46 {strides = array<i32>} : memref<1x8x128xf32, #tpu.memory_space<vmem>>, vector<1x8x128xf32>,
    } else {
    }
    %c0 = arith.constant 0 : index
    %3 = memref.load %arg2[%c0] : memref<2xf32, #tpu.memory_space<smem>>
    %c1 = arith.constant 1 : index
    %4 = memref.load %arg2[%c1] : memref<2xf32, #tpu.memory_space<smem>>
    %c0_1 = arith.constant 0 : index
    %c0_2 = arith.constant 0 : index
    %5 = vector.load %arg3[%c0_1, %c0_2] : memref<32x128xbf16, #tpu.memory_space<vmem>>, vector<32x128xbf16>
    %6 = arith.extf %5 : vector<32x128xbf16> to vector<32x128xf32>
    %c0_3 = arith.constant 0 : index
    %c0_4 = arith.constant 0 : index
    %7 = vector.load %arg4[%c0_3, %c0_4] : memref<32x128xi8, #tpu.memory_space<vmem>>, vector<32x128xi8>
    %8 = arith.sitofp %7 : vector<32x128xi8> to vector<32x128xf32>
    %c0_5 = arith.constant 0 : index
    %c0_6 = arith.constant 0 : index
    %9 = vector.load %arg5[%c0_5, %c0_6] : memref<32x128xf32, #tpu.memory_space<vmem>>, vector<32x128xf32>
    %10 = vector.broadcast %4 : f32 to vector<32x128xf32>
    %11 = arith.mulf %9, %10 : vector<32x128xf32>
    %12 = vector.broadcast %3 : f32 to vector<32x128xf32>
    %13 = arith.subf %12, %11 : vector<32x128xf32>
    %cst = arith.constant 2.000000e+00 : f32
    %14 = vector.broadcast %cst : f32 to vector<32x128xf32>
    %15 = arith.mulf %14, %8 : vector<32x128xf32>
    %cst_7 = arith.constant 1.000000e+00 : f32
    %16 = vector.broadcast %cst_7 : f32 to vector<32x128xf32>
    %17 = arith.subf %15, %16 : vector<32x128xf32>
    %18 = arith.mulf %13, %17 : vector<32x128xf32>
    %cst_8 = arith.constant 1.000000e+00 : f32
    %19 = vector.broadcast %cst_8 : f32 to vector<32x128xf32>
    %20 = arith.addf %19, %18 : vector<32x128xf32>
    %21 = arith.mulf %6, %20 : vector<32x128xf32>
    %cst_9 = arith.constant 0.000000e+00 : f32
    %22 = vector.broadcast %cst_9 : f32 to vector<32x128xf32>
    %23 = arith.maximumf %21, %22 : vector<32x128xf32>
    %24 = arith.mulf %21, %8 : vector<32x128xf32>
    %25 = arith.subf %23, %24 : vector<32x128xf32>
    %26 = math.absf %21 : vector<32x128xf32>
    %cst_10 = arith.constant 0.000000e+00 : f32
    %27 = vector.broadcast %cst_10 : f32 to vector<32x128xf32>
    %28 = arith.subf %27, %26 : vector<32x128xf32>
    %29 = math.exp %28 : vector<32x128xf32>
    %30 = math.log1p %29 : vector<32x128xf32>
    %31 = arith.addf %25, %30 : vector<32x128xf32>
    %cst_11 = arith.constant 1.000000e-03 : f32
    %32 = vector.broadcast %cst_11 : f32 to vector<32x128xf32>
    %33 = arith.mulf %9, %32 : vector<32x128xf32>
    %cst_12 = arith.constant 1.000000e+00 : f32
    %34 = vector.broadcast %cst_12 : f32 to vector<32x128xf32>
    %35 = arith.addf %34, %33 : vector<32x128xf32>
    %36 = tpu.reciprocal %35 : vector<32x128xf32> -> vector<32x128xf32>
    %cst_13 = arith.constant 3.000000e-01 : f32
    %37 = vector.broadcast %cst_13 : f32 to vector<32x128xf32>
    %38 = arith.mulf %37, %36 : vector<32x128xf32>
    %39 = arith.addf %31, %38 : vector<32x128xf32>
    %c0_14 = arith.constant 0 : index
    %c0_15 = arith.constant 0 : index
    %c0_16 = arith.constant 0 : index
    %40 = vector.load %arg6[%c0_14, %c0_15, %c0_16] : memref<1x8x128xf32, #tpu.memory_space<vmem>>, vector<1x8x128xf32>
    %41 = vector.shape_cast %39 : vector<32x128xf32> to vector<4x8x128xf32>
    %cst_17 = arith.constant dense<0.000000e+00> : vector<8x128xf32>
    %42 = vector.multi_reduction <add>, %41, %cst_17 [0] : vector<4x8x128xf32> to vector<8x128xf32>
    %43 = vector.shape_cast %42 : vector<8x128xf32> to vector<1x8x128xf32>
    %44 = arith.addf %40, %43 : vector<1x8x128xf32>
    %c0_18 = arith.constant 0 : index
    %c0_19 = arith.constant 0 : index
    %c0_20 = arith.constant 0 : index
    %45 = vector.load %arg6[%c0_18, %c0_19, %c0_20] : memref<1x8x128xf32, #tpu.memory_space<vmem>>, vector<1x8x128xf32>
    tpu.vector_store %arg6[%c0_18, %c0_19, %c0_20], %44 {strides = array<i32>} : memref<1x8x128xf32, #tpu.memory_space<vmem>>, vector<1x8x128xf32>,
    return
  }
  func.func @transform_0(%arg0: i32, %arg1: i32) -> i32 {
    %c0_i32 = arith.constant 0 : i32
    %c0_i32_0 = arith.constant 0 : i32
    return %c0_i32 : i32
  }
  func.func @transform_1(%arg0: i32, %arg1: i32) -> (i32, i32) {
    %c1_i32 = arith.constant 1 : i32
    %0 = arith.muli %arg0, %c1_i32 : i32
    %1 = arith.addi %0, %arg1 : i32
    %c0_i32 = arith.constant 0 : i32
    %c0_i32_0 = arith.constant 0 : i32
    return %1, %c0_i32 : i32, i32
  }
  func.func @transform_2(%arg0: i32, %arg1: i32) -> (i32, i32) {
    %c1_i32 = arith.constant 1 : i32
    %0 = arith.muli %arg0, %c1_i32 : i32
    %1 = arith.addi %0, %arg1 : i32
    %c0_i32 = arith.constant 0 : i32
    %c0_i32_0 = arith.constant 0 : i32
    return %1, %c0_i32 : i32, i32
  }
  func.func @transform_3(%arg0: i32, %arg1: i32) -> (i32, i32) {
    %c1_i32 = arith.constant 1 : i32
    %0 = arith.muli %arg0, %c1_i32 : i32
    %1 = arith.addi %0, %arg1 : i32
    %c0_i32 = arith.constant 0 : i32
    %c0_i32_0 = arith.constant 0 : i32
    return %1, %c0_i32 : i32, i32
  }
  func.func @transform_4(%arg0: i32, %arg1: i32) -> (i32, i32, i32) {
    %c0_i32 = arith.constant 0 : i32
    %c0_i32_0 = arith.constant 0 : i32
    %c0_i32_1 = arith.constant 0 : i32
    return %arg0, %c0_i32, %c0_i32_0 : i32, i32, i32
  }
}

</mosaic_0001>

<llo_original>
// kernel: tpu_custom_call.1
$region0: #{tpu_custom_call.1}
  #allocation0 [shape = 'u32[]', space=smem, size = 0x4, offset = 0x4, fixed_abs, tag = 'smem constant byte address 0x4 - core index']
  #allocation1 [shape = 'u32[144,128]{1,0:T(1,128)}', space=vmem, size = 0x12000, scoped, tag = 'internal scratch']
  %s0 = inlined_call_operand.hbm [shape: f32[2], index: 0, kind: input, shape index: {}]
  %s1 = inlined_call_operand.hbm [shape: bf16[32,128], index: 1, kind: input, shape index: {}]
  %s2 = inlined_call_operand.hbm [shape: s8[32,128], index: 2, kind: input, shape index: {}]
  %s3 = inlined_call_operand.hbm [shape: f32[32,128], index: 3, kind: input, shape index: {}]
  %s4 = inlined_call_operand.hbm [shape: f32[1,8,128], index: 4, kind: output, shape index: {}]
  %s5 = sld [smem:[#allocation0]]
  $region46: #{tpu_custom_call.1} parent=0
    _
  %s7 = ssub.s32 1, %s5
  %s8 = scalar_select 0, %s7, %s5
  $region1: #{tpu_custom_call.1} parent=0
    #allocation2 [shape = 'u8[512]{0}', space=smem, size = 0x200, scoped, tag = 'input window, operand 0, single buffered']
    #allocation3 [shape = 's32[1]{0}', space=sflag, size = 0x4, scoped, tag = 'scoped memory for tpu_custom_call.1']
    #allocation4 [shape = 's32[1]{0}', space=sflag, size = 0x4, scoped, tag = 'scoped memory for tpu_custom_call.1']
    #allocation5 [shape = 's32[1]{0}', space=sflag, size = 0x4, scoped, tag = 'scoped memory for tpu_custom_call.1']
    #allocation6 [shape = 'u8[8192]{0}', space=vmem, size = 0x2000, scoped, tag = 'input window, operand 1, single buffered']
    #allocation7 [shape = 'u8[4096]{0}', space=vmem, size = 0x1000, scoped, tag = 'input window, operand 2, single buffered']
    #allocation8 [shape = 's32[1]{0}', space=sflag, size = 0x4, scoped, tag = 'scoped memory for tpu_custom_call.1']
    #allocation9 [shape = 'u8[16384]{0}', space=vmem, size = 0x4000, scoped, tag = 'input window, operand 3, single buffered']
    #allocation10 [shape = 'u8[4096]{0}', space=vmem, size = 0x1000, scoped, tag = 'output window, operand 0, single buffered']
    %9 = vsyncpa [#allocation5], 0
    %10 = vsyncpa [#allocation3], 0
    %11 = vsyncpa [#allocation8], 0
    %12 = vsyncpa [#allocation4], 0
    // Predicated region
    $region2: #{tpu_custom_call.1} parent=1 // pred_check
      _
    $region3: #{tpu_custom_call.1} parent=1 // pred_check_branch
      %14 = sbr.rel (0) target = $region5
    $region4: #{tpu_custom_call.1} parent=1 // pred_region
      %s16 = ssub.s32 16, 16
      %17 = vsyncadd [#allocation5], %s16
      %20 = dma.hbm_to_smem %s0, 16, [#allocation2], [#allocation5]
    $region5: #{tpu_custom_call.1} parent=1 // pred_fallthru
      _
    // Predicated region
    $region6: #{tpu_custom_call.1} parent=1 // pred_check
      _
    $region7: #{tpu_custom_call.1} parent=1 // pred_check_branch
      %22 = sbr.rel (0) target = $region9
    $region8: #{tpu_custom_call.1} parent=1 // pred_region
      %s23 = sadd.s32 0, 0
      %s24 = smul.u32 4, %s23
      %s26 = ssub.s32 256, 256
      %27 = vsyncadd [#allocation3], %s26
      %s28 = smul.addr %s24, 64
      %s29 = scalar_lea.hbm %s1, %s28
      %s30 = sshll.u32 [#allocation6], 4
      %s31 = int_to_ptr.vmem [resolvable:$true] %s30
      %36 = dma.hbm_to_vmem [thread:$0]  %s29, 256, %s31, [#allocation3], 64, 64, 4
    $region9: #{tpu_custom_call.1} parent=1 // pred_fallthru
      _
    // Predicated region
    $region10: #{tpu_custom_call.1} parent=1 // pred_check
      _
    $region11: #{tpu_custom_call.1} parent=1 // pred_check_branch
      %38 = sbr.rel (0) target = $region13
    $region12: #{tpu_custom_call.1} parent=1 // pred_region
      %s39 = sadd.s32 0, 0
      %s41 = ssub.s32 128, 128
      %42 = vsyncadd [#allocation8], %s41
      %s43 = smul.addr %s39, 128
      %s44 = scalar_lea.hbm %s2, %s43
      %s46 = sshll.u32 [#allocation7], 4
      %s47 = int_to_ptr.vmem [resolvable:$true] %s46
      %49 = dma.hbm_to_vmem [thread:$0]  %s44, 128, %s47, [#allocation8]
    $region13: #{tpu_custom_call.1} parent=1 // pred_fallthru
      _
    // Predicated region
    $region14: #{tpu_custom_call.1} parent=1 // pred_check
      _
    $region15: #{tpu_custom_call.1} parent=1 // pred_check_branch
      %51 = sbr.rel (0) target = $region17
    $region16: #{tpu_custom_call.1} parent=1 // pred_region
      %s52 = sadd.s32 0, 0
      %s53 = smul.u32 4, %s52
      %s55 = ssub.s32 512, 512
      %56 = vsyncadd [#allocation8], %s55
      %s57 = smul.addr %s53, 128
      %s58 = scalar_lea.hbm %s3, %s57
      %s59 = sshll.u32 [#allocation9], 4
      %s60 = int_to_ptr.vmem [resolvable:$true] %s59
      %65 = dma.hbm_to_vmem [thread:$0]  %s58, 512, %s60, [#allocation8], 128, 128, 8
    $region17: #{tpu_custom_call.1} parent=1 // pred_fallthru
      _
    // Predicated region
    $region18: #{tpu_custom_call.1} parent=1 // pred_check
      _
    $region19: #{tpu_custom_call.1} parent=1 // pred_check_branch
      %67 = sbr.rel (0) target = $region21
    $region20: #{tpu_custom_call.1} parent=1 // pred_region
      %68 = dma.done [#allocation5], 16
    $region21: #{tpu_custom_call.1} parent=1 // pred_fallthru
      _
    // Predicated region
    $region22: #{tpu_custom_call.1} parent=1 // pred_check
      _
    $region23: #{tpu_custom_call.1} parent=1 // pred_check_branch
      %70 = sbr.rel (0) target = $region25
    $region24: #{tpu_custom_call.1} parent=1 // pred_region
      %71 = dma.done [#allocation3], 256
    $region25: #{tpu_custom_call.1} parent=1 // pred_fallthru
      _
    // Predicated region
    $region26: #{tpu_custom_call.1} parent=1 // pred_check
      _
    $region27: #{tpu_custom_call.1} parent=1 // pred_check_branch
      %73 = sbr.rel (0) target = $region29
    $region28: #{tpu_custom_call.1} parent=1 // pred_region
      %74 = dma.done [#allocation8], 128
    $region29: #{tpu_custom_call.1} parent=1 // pred_fallthru
      _
    // Predicated region
    $region30: #{tpu_custom_call.1} parent=1 // pred_check
      _
    $region31: #{tpu_custom_call.1} parent=1 // pred_check_branch
      %76 = sbr.rel (0) target = $region33
    $region32: #{tpu_custom_call.1} parent=1 // pred_region
      %77 = dma.done [#allocation8], 512
    $region33: #{tpu_custom_call.1} parent=1 // pred_fallthru
      _
    %78 = sfence
    %s79 = sadd.s32 0, 0
    %s80 = smul.u32 4, %s79
    %s81 = sadd.s32 0, 0
    %s82 = sadd.s32 0, 0
    %s83 = smul.u32 4, %s82
    %p84 = scmp.eq.s32.totalorder 0, 0
    // Predicated region
    $region34: #{tpu_custom_call.1} parent=1 // pred_check
      %p85 = pneg %p84
    $region35: #{tpu_custom_call.1} parent=1 // pred_check_branch
      %87 = sbr.rel (%p85) target = $region37
    $region36: #{tpu_custom_call.1} parent=1 // pred_region
      %88 = vst [vmem:[#allocation10] sm:$0xff] 0.0
    $region37: #{tpu_custom_call.1} parent=1 // pred_fallthru
      _
    %s89 = sld [smem:[#allocation2]]
    %s90 = sld [smem:[#allocation2 + $0x1]]
    %v91 = vld [vmem:[#allocation6] sm:$0xf]
    %v92 = vld [vmem:[#allocation6 + $0x4] sm:$0xf]
    %v93 = vld [vmem:[#allocation6 + $0x8] sm:$0xf]
    %v94 = vld [vmem:[#allocation6 + $0xc] sm:$0xf]
    %v95 = vunpack.c.l.bf16 %v91
    %v96 = vunpack.c.l.bf16 %v92
    %v97 = vunpack.c.l.bf16 %v93
    %v98 = vunpack.c.l.bf16 %v94
    %v99 = vld [vmem:[#allocation7] sm:$0xff]
    %v100 = vunpack.c.0.s8 %v99
    %v101 = vunpack.c.1.s8 %v99
    %v102 = vunpack.c.2.s8 %v99
    %v103 = vunpack.c.3.s8 %v99
    %v104 = vcvt.s32.f32 %v100
    %v105 = vcvt.s32.f32 %v101
    %v106 = vcvt.s32.f32 %v102
    %v107 = vcvt.s32.f32 %v103
    %v108 = vld [vmem:[#allocation9] sm:$0xff]
    %v109 = vld [vmem:[#allocation9 + $0x8] sm:$0xff]
    %v110 = vld [vmem:[#allocation9 + $0x10] sm:$0xff]
    %v111 = vld [vmem:[#allocation9 + $0x18] sm:$0xff]
    %v112 = vstv %s90
    %v113 = vmul.f32 %v108, %v112
    %v114 = vmul.f32 %v109, %v112
    %v115 = vmul.f32 %v110, %v112
    %v116 = vmul.f32 %v111, %v112
    %v117 = vstv %s89
    %v118 = vsub.f32 %v117, %v113
    %v119 = vsub.f32 %v117, %v114
    %v120 = vsub.f32 %v117, %v115
    %v121 = vsub.f32 %v117, %v116
    %v122 = vmul.f32 %v104, 2.0
    %v123 = vmul.f32 %v105, 2.0
    %v124 = vmul.f32 %v106, 2.0
    %v125 = vmul.f32 %v107, 2.0
    %v126 = vsub.f32 %v122, 1.0
    %v127 = vsub.f32 %v123, 1.0
    %v128 = vsub.f32 %v124, 1.0
    %v129 = vsub.f32 %v125, 1.0
    %v130 = vmul.f32 %v118, %v126
    %v131 = vmul.f32 %v119, %v127
    %v132 = vmul.f32 %v120, %v128
    %v133 = vmul.f32 %v121, %v129
    %v134 = vadd.f32 %v130, 1.0
    %v135 = vadd.f32 %v131, 1.0
    %v136 = vadd.f32 %v132, 1.0
    %v137 = vadd.f32 %v133, 1.0
    %v138 = vmul.f32 %v95, %v134
    %v139 = vmul.f32 %v96, %v135
    %v140 = vmul.f32 %v97, %v136
    %v141 = vmul.f32 %v98, %v137
    %v142 = vmax.f32 %v138, 0.0
    %v143 = vmax.f32 %v139, 0.0
    %v144 = vmax.f32 %v140, 0.0
    %v145 = vmax.f32 %v141, 0.0
    %v146 = vmul.f32 %v138, %v104
    %v147 = vmul.f32 %v139, %v105
    %v148 = vmul.f32 %v140, %v106
    %v149 = vmul.f32 %v141, %v107
    %v150 = vsub.f32 %v142, %v146
    %v151 = vsub.f32 %v143, %v147
    %v152 = vsub.f32 %v144, %v148
    %v153 = vsub.f32 %v145, %v149
    %v154 = vand.u32 2147483647, %v138
    %v155 = vand.u32 2147483647, %v139
    %v156 = vand.u32 2147483647, %v140
    %v157 = vand.u32 2147483647, %v141
    %v158 = vsub.f32 0.0, %v154
    %v159 = vsub.f32 0.0, %v155
    %v160 = vsub.f32 0.0, %v156
    %v161 = vsub.f32 0.0, %v157
    %v162 = vmul.f32 %v158, 1.442695
    %v163 = vpow.pop %v162
    %v164 = vmul.f32 %v159, 1.442695
    %v165 = vpow.pop %v164
    %v166 = vmul.f32 %v160, 1.442695
    %v167 = vpow.pop %v166
    %v168 = vmul.f32 %v161, 1.442695
    %v169 = vpow.pop %v168
    %v170 = vadd.f32 %v163, 1.0
    %v171 = vlog2.pop %v170
    %v172 = vmul.f32 %v171, 0.6931472
    %v173 = vmul.f32 -0.5, %v163
    %v174 = vadd.f32 %v173, 1.0
    %v175 = vmul.f32 %v174, %v163
    %v176 = vand.u32 2147483647, %v163
    %vm177 = vcmp.lt.f32.partialorder %v176, 0.0004427343
    %v178 = vsel %vm177, %v175, %v172
    %v179 = vadd.f32 %v165, 1.0
    %v180 = vlog2.pop %v179
    %v181 = vmul.f32 %v180, 0.6931472
    %v182 = vmul.f32 -0.5, %v165
    %v183 = vadd.f32 %v182, 1.0
    %v184 = vmul.f32 %v183, %v165
    %v185 = vand.u32 2147483647, %v165
    %vm186 = vcmp.lt.f32.partialorder %v185, 0.0004427343
    %v187 = vsel %vm186, %v184, %v181
    %v188 = vadd.f32 %v167, 1.0
    %v189 = vlog2.pop %v188
    %v190 = vmul.f32 %v189, 0.6931472
    %v191 = vmul.f32 -0.5, %v167
    %v192 = vadd.f32 %v191, 1.0
    %v193 = vmul.f32 %v192, %v167
    %v194 = vand.u32 2147483647, %v167
    %vm195 = vcmp.lt.f32.partialorder %v194, 0.0004427343
    %v196 = vsel %vm195, %v193, %v190
    %v197 = vadd.f32 %v169, 1.0
    %v198 = vlog2.pop %v197
    %v199 = vmul.f32 %v198, 0.6931472
    %v200 = vmul.f32 -0.5, %v169
    %v201 = vadd.f32 %v200, 1.0
    %v202 = vmul.f32 %v201, %v169
    %v203 = vand.u32 2147483647, %v169
    %vm204 = vcmp.lt.f32.partialorder %v203, 0.0004427343
    %v205 = vsel %vm204, %v202, %v199
    %v206 = vadd.f32 %v150, %v178
    %v207 = vadd.f32 %v151, %v187
    %v208 = vadd.f32 %v152, %v196
    %v209 = vadd.f32 %v153, %v205
    %v210 = vmul.f32 %v108, 0.001
    %v211 = vmul.f32 %v109, 0.001
    %v212 = vmul.f32 %v110, 0.001
    %v213 = vmul.f32 %v111, 0.001
    %v214 = vadd.f32 %v210, 1.0
    %v215 = vadd.f32 %v211, 1.0
    %v216 = vadd.f32 %v212, 1.0
    %v217 = vadd.f32 %v213, 1.0
    %v218 = vrcp.pop %v214
    %v219 = vrcp.pop %v215
    %v220 = vrcp.pop %v216
    %v221 = vrcp.pop %v217
    %v222 = vmul.f32 %v218, 0.3
    %v223 = vmul.f32 %v219, 0.3
    %v224 = vmul.f32 %v220, 0.3
    %v225 = vmul.f32 %v221, 0.3
    %v226 = vadd.f32 %v206, %v222
    %v227 = vadd.f32 %v207, %v223
    %v228 = vadd.f32 %v208, %v224
    %v229 = vadd.f32 %v209, %v225
    %v230 = vld [vmem:[#allocation10] sm:$0xff]
    %v231 = vadd.f32 %v226, %v227
    %v232 = vadd.f32 %v231, %v228
    %v233 = vadd.f32 %v232, %v229
    %v234 = vadd.f32 %v230, %v233
    %235 = vst [vmem:[#allocation10] sm:$0xff] %v234
    // Predicated region
    $region38: #{tpu_custom_call.1} parent=1 // pred_check
      _
    $region39: #{tpu_custom_call.1} parent=1 // pred_check_branch
      %237 = sbr.rel (0) target = $region41
    $region40: #{tpu_custom_call.1} parent=1 // pred_region
      %s239 = ssub.s32 128, 128
      %240 = vsyncadd [#allocation4], %s239
      %s242 = sshll.u32 [#allocation10], 4
      %s243 = int_to_ptr.vmem [resolvable:$true] %s242
      %245 = dma.vmem_to_hbm [thread:$0]  %s243, 128, %s4, [#allocation4]
    $region41: #{tpu_custom_call.1} parent=1 // pred_fallthru
      _
    // Predicated region
    $region42: #{tpu_custom_call.1} parent=1 // pred_check
      _
    $region43: #{tpu_custom_call.1} parent=1 // pred_check_branch
      %247 = sbr.rel (0) target = $region45
    $region44: #{tpu_custom_call.1} parent=1 // pred_region
      %248 = dma.done [#allocation4], 128
    $region45: #{tpu_custom_call.1} parent=1 // pred_fallthru
      _
    %249 = vsyncpa [#allocation3], 1
    %250 = vsyncpa [#allocation8], 1
    %251 = vsyncpa [#allocation4], 1
    %252 = vsyncpa [#allocation5], 1

</llo_original>
